<compile_context>
chip_gen: v7x
topology: tpu7x:2x2x1
jax: 0.10.0
libtpu: 0.0.40
codegen_flags: <defaults>
</compile_context>

<pallas_src>
import math

import jax
import jax.numpy as jnp
from jax.experimental import pallas as pl
from jax.experimental.pallas import tpu as pltpu

BN_EPS = 1e-5
LANE = 128
IN_DIM = 16
N_OUT = 5
LAYER_DIMS = [(IN_DIM, 64), (64, 32), (32, 32), (32, N_OUT)]
_K_SIZES = [fi for fi, _ in LAYER_DIMS]            # real contraction dims [16,64,32,32]
_ROW_OFF = [0]
for _k in _K_SIZES:
    _ROW_OFF.append(_ROW_OFF[-1] + _k)             # [0, 16, 80, 112, 144]
_W_ROWS = _ROW_OFF[-1]                             # 144 (multiple of the bf16 sublane tile)


def _mlp_kernel(x_ref, w_ref, bn_ref, o_ref):
    """Fused 4x Linear + 3x (train-mode BN + ReLU) + dim-0 softmax, one block.

    x_ref  : (B, 16)    f32   un-padded input
    w_ref  : (144, 128) bf16  stacked ragged-K weights, output dims padded to 128
    bn_ref : (8, 128)   f32   rows [g1, be1, g2, be2, g3, be3, 0, 0]; padded lanes zero
    o_ref  : (B, 128)   f32   lane-dense softmax output (wrapper slices [:, :5])
    """
    B = x_ref.shape[0]
    inv_b = 1.0 / B                                # static python float
    bn = bn_ref[...]                               # whole BN slab: single vreg load

    def bn_relu(h, layer):
        # One-pass batch statistics: the two axis-0 reductions are independent
        # (overlap on the XLUs); BN affine folded into one scale/shift.
        s = jnp.sum(h, axis=0, keepdims=True)
        ss = jnp.sum(h * h, axis=0, keepdims=True)
        mean = s * inv_b
        var = jnp.maximum(ss * inv_b - mean * mean, 0.0)   # guard f32 cancellation
        inv = jax.lax.rsqrt(var + BN_EPS)                  # f32 EUP
        gamma = bn[2 * layer:2 * layer + 1, :]             # (1,128) value slice
        beta = bn[2 * layer + 1:2 * layer + 2, :]
        scale = gamma * inv
        shift = beta - mean * scale
        return jnp.maximum(h * scale + shift, 0.0)

    def layer_dot(a_f32, layer):
        # bf16 operands into the MXU (single-pass matmul), f32 accumulation.
        k = _K_SIZES[layer]
        a = a_f32[:, :k].astype(jnp.bfloat16)              # ragged K: contract real dims only
        w = w_ref[_ROW_OFF[layer]:_ROW_OFF[layer + 1], :]  # static ref slice (zero cost)
        return jnp.dot(a, w, preferred_element_type=jnp.float32)

    h = layer_dot(x_ref[...], 0)
    h = bn_relu(h, 0)
    h = layer_dot(h, 1)
    h = bn_relu(h, 1)
    h = layer_dot(h, 2)
    h = bn_relu(h, 2)
    logits = layer_dot(h, 3)

    # nn.Softmax(0): softmax over the batch dimension.  Max-subtraction is
    # dropped: post-BN activations are O(1) and w4 is bounded, so f32 exp is
    # safe; saves one XLU reduction on the serial critical path.
    e = jnp.exp(logits)
    denom = jnp.sum(e, axis=0, keepdims=True)
    o_ref[...] = e * pl.reciprocal(denom, approx=True)      # EUP recip + VPU mul


def pack_params(params):
    """Pack weights into one lane-dense bf16 slab (ragged K, padded output dims)
    and BN gamma/beta into one f32 slab.  3 input DMAs total (~40 KiB)."""
    w_slab = jnp.zeros((_W_ROWS, LANE), jnp.float32)
    for i, (fi, fo) in enumerate(LAYER_DIMS):
        w_slab = w_slab.at[_ROW_OFF[i]:_ROW_OFF[i] + fi, :fo].set(params[f"w{i + 1}"])
    bn_slab = jnp.zeros((8, LANE), jnp.float32)
    for i, n in enumerate((64, 32, 32)):
        bn_slab = bn_slab.at[2 * i, :n].set(params[f"g{i + 1}"][0])
        bn_slab = bn_slab.at[2 * i + 1, :n].set(params[f"be{i + 1}"][0])
    return w_slab.astype(jnp.bfloat16), bn_slab


def mlp_forward(x, w_slab, bn_slab):
    B = x.shape[0]
    # Single normalization group (BN stats and dim-0 softmax span the whole
    # batch) -> one gridless block; weights live in VMEM for the whole call.
    # VMEM guard (forward-looking, v7x has 64 MiB / 32 MiB default scoped):
    # a handful of live (B,128) f32 activations -> keep B <= ~16K rows here.
    assert B <= 16384, "batch too large for the single-block VMEM design"
    vm = pl.BlockSpec(memory_space=pltpu.MemorySpace.VMEM)
    out_pad = pl.pallas_call(
        _mlp_kernel,
        out_shape=jax.ShapeDtypeStruct((B, LANE), jnp.float32),  # lane-dense output
        in_specs=[vm, vm, vm],
        out_specs=vm,
    )(x, w_slab, bn_slab)
    return out_pad[:, :N_OUT]


def init_params(key):
    """Deterministic init mirroring PyTorch nn.Linear / nn.BatchNorm1d defaults.

    Biases are generated (for the pure-JAX reference) but NOT fed to the kernel:
    train-mode BatchNorm and the dim-0 softmax cancel them exactly.
    """
    params = {}
    keys = jax.random.split(key, 2 * len(LAYER_DIMS))
    for i, (fan_in, fan_out) in enumerate(LAYER_DIMS):
        bound = 1.0 / math.sqrt(fan_in)
        params[f"w{i + 1}"] = jax.random.uniform(
            keys[2 * i], (fan_in, fan_out), jnp.float32, -bound, bound)
        params[f"b{i + 1}"] = jax.random.uniform(
            keys[2 * i + 1], (1, fan_out), jnp.float32, -bound, bound)
    for i, n in enumerate((64, 32, 32)):
        params[f"g{i + 1}"] = jnp.ones((1, n), jnp.float32)    # gamma default
        params[f"be{i + 1}"] = jnp.zeros((1, n), jnp.float32)  # beta default
    return params


def reference_forward(x, params):
    """Pure-JAX f32 reference matching the PyTorch module (biases included)."""
    def bn(h, g, b):
        m = jnp.mean(h, axis=0, keepdims=True)
        v = jnp.mean((h - m) ** 2, axis=0, keepdims=True)
        return (h - m) * jax.lax.rsqrt(v + BN_EPS) * g + b

    h = x @ params["w1"] + params["b1"]
    h = jnp.maximum(bn(h, params["g1"], params["be1"]), 0.0)
    h = h @ params["w2"] + params["b2"]
    h = jnp.maximum(bn(h, params["g2"], params["be2"]), 0.0)
    h = h @ params["w3"] + params["b3"]
    h = jnp.maximum(bn(h, params["g3"], params["be3"]), 0.0)
    logits = h @ params["w4"] + params["b4"]
    return jax.nn.softmax(logits, axis=0)


if __name__ == "__main__":
    key = jax.random.PRNGKey(0)
    pkey, xkey = jax.random.split(key)
    params = init_params(pkey)
    w_slab, bn_slab = pack_params(params)

    B = 8  # small batch; input feature dim fixed at 16 by the module
    x = jax.random.normal(xkey, (B, IN_DIM), jnp.float32)

    out = mlp_forward(x, w_slab, bn_slab)
    jax.block_until_ready(out)

    assert out.shape == (B, N_OUT)
    # softmax over dim 0 -> each column sums to ~1 (approx reciprocal in-kernel)
    assert jnp.allclose(jnp.sum(out, axis=0), jnp.ones(N_OUT), atol=5e-3)
    # Validate against the bias-including f32 pure-JAX reference.  bf16 MXU
    # operands vs f32 weights bound the probability error to ~1e-2 absolute.
    ref = reference_forward(x, params)
    assert jnp.allclose(out, ref, atol=1e-2, rtol=2e-2), float(jnp.max(jnp.abs(out - ref)))
    print("KERNEL_OK")
</pallas_src>

<mosaic_0001>
module attributes {stable_mosaic.version = 11 : i64} {
  func.func @_mlp_kernel(%arg0: memref<8x16xf32, #tpu.memory_space<vmem>>, %arg1: memref<144x128xbf16, #tpu.memory_space<vmem>>, %arg2: memref<8x128xf32, #tpu.memory_space<vmem>>, %arg3: memref<8x128xf32, #tpu.memory_space<vmem>>) attributes {dimension_semantics = [], scalar_prefetch = 0 : i64, scratch_operands = 0 : i64, tpu.core_type = #tpu.core_type<tc>} {
    %c0 = arith.constant 0 : index
    %c0_0 = arith.constant 0 : index
    %0 = vector.load %arg2[%c0, %c0_0] : memref<8x128xf32, #tpu.memory_space<vmem>>, vector<8x128xf32>
    %c0_1 = arith.constant 0 : index
    %c0_2 = arith.constant 0 : index
    %1 = vector.load %arg0[%c0_1, %c0_2] : memref<8x16xf32, #tpu.memory_space<vmem>>, vector<8x16xf32>
    %2 = arith.truncf %1 : vector<8x16xf32> to vector<8x16xbf16>
    %c0_3 = arith.constant 0 : index
    %c0_4 = arith.constant 0 : index
    %3 = vector.load %arg1[%c0_3, %c0_4] : memref<144x128xbf16, #tpu.memory_space<vmem>>, vector<16x128xbf16>
    %cst = arith.constant dense<0.000000e+00> : vector<8x128xf32>
    %4 = tpu.matmul %2, %3, %cst {dimension_numbers = #tpu.dot_dimension_numbers<[1], [0], [0], [1], [0, 0, 1, 1], [], []>} : vector<8x16xbf16>, vector<16x128xbf16>, vector<8x128xf32> -> vector<8x128xf32>
    %cst_5 = arith.constant dense<0.000000e+00> : vector<128xf32>
    %5 = vector.multi_reduction <add>, %4, %cst_5 [0] : vector<8x128xf32> to vector<128xf32>
    %6 = vector.shape_cast %5 : vector<128xf32> to vector<1x128xf32>
    %7 = arith.mulf %4, %4 : vector<8x128xf32>
    %cst_6 = arith.constant dense<0.000000e+00> : vector<128xf32>
    %8 = vector.multi_reduction <add>, %7, %cst_6 [0] : vector<8x128xf32> to vector<128xf32>
    %9 = vector.shape_cast %8 : vector<128xf32> to vector<1x128xf32>
    %cst_7 = arith.constant 1.250000e-01 : f32
    %10 = vector.broadcast %cst_7 : f32 to vector<1x128xf32>
    %11 = arith.mulf %6, %10 : vector<1x128xf32>
    %cst_8 = arith.constant 1.250000e-01 : f32
    %12 = vector.broadcast %cst_8 : f32 to vector<1x128xf32>
    %13 = arith.mulf %9, %12 : vector<1x128xf32>
    %14 = arith.mulf %11, %11 : vector<1x128xf32>
    %15 = arith.subf %13, %14 : vector<1x128xf32>
    %cst_9 = arith.constant 0.000000e+00 : f32
    %16 = vector.broadcast %cst_9 : f32 to vector<1x128xf32>
    %17 = arith.maximumf %15, %16 : vector<1x128xf32>
    %cst_10 = arith.constant 9.99999974E-6 : f32
    %18 = vector.broadcast %cst_10 : f32 to vector<1x128xf32>
    %19 = arith.addf %17, %18 : vector<1x128xf32>
    %20 = math.rsqrt %19 : vector<1x128xf32>
    %21 = vector.extract_strided_slice %0 {offsets = [0, 0], sizes = [1, 128], strides = [1, 1]} : vector<8x128xf32> to vector<1x128xf32>
    %22 = vector.extract_strided_slice %0 {offsets = [1, 0], sizes = [1, 128], strides = [1, 1]} : vector<8x128xf32> to vector<1x128xf32>
    %23 = arith.mulf %21, %20 : vector<1x128xf32>
    %24 = arith.mulf %11, %23 : vector<1x128xf32>
    %25 = arith.subf %22, %24 : vector<1x128xf32>
    %26 = vector.broadcast %23 : vector<1x128xf32> to vector<8x128xf32>
    %27 = arith.mulf %4, %26 : vector<8x128xf32>
    %28 = vector.broadcast %25 : vector<1x128xf32> to vector<8x128xf32>
    %29 = arith.addf %27, %28 : vector<8x128xf32>
    %cst_11 = arith.constant 0.000000e+00 : f32
    %30 = vector.broadcast %cst_11 : f32 to vector<8x128xf32>
    %31 = arith.maximumf %29, %30 : vector<8x128xf32>
    %32 = vector.extract_strided_slice %31 {offsets = [0, 0], sizes = [8, 64], strides = [1, 1]} : vector<8x128xf32> to vector<8x64xf32>
    %33 = arith.truncf %32 : vector<8x64xf32> to vector<8x64xbf16>
    %c16 = arith.constant 16 : index
    %c0_12 = arith.constant 0 : index
    %34 = vector.load %arg1[%c16, %c0_12] : memref<144x128xbf16, #tpu.memory_space<vmem>>, vector<64x128xbf16>
    %cst_13 = arith.constant dense<0.000000e+00> : vector<8x128xf32>
    %35 = tpu.matmul %33, %34, %cst_13 {dimension_numbers = #tpu.dot_dimension_numbers<[1], [0], [0], [1], [0, 0, 1, 1], [], []>} : vector<8x64xbf16>, vector<64x128xbf16>, vector<8x128xf32> -> vector<8x128xf32>
    %cst_14 = arith.constant dense<0.000000e+00> : vector<128xf32>
    %36 = vector.multi_reduction <add>, %35, %cst_14 [0] : vector<8x128xf32> to vector<128xf32>
    %37 = vector.shape_cast %36 : vector<128xf32> to vector<1x128xf32>
    %38 = arith.mulf %35, %35 : vector<8x128xf32>
    %cst_15 = arith.constant dense<0.000000e+00> : vector<128xf32>
    %39 = vector.multi_reduction <add>, %38, %cst_15 [0] : vector<8x128xf32> to vector<128xf32>
    %40 = vector.shape_cast %39 : vector<128xf32> to vector<1x128xf32>
    %cst_16 = arith.constant 1.250000e-01 : f32
    %41 = vector.broadcast %cst_16 : f32 to vector<1x128xf32>
    %42 = arith.mulf %37, %41 : vector<1x128xf32>
    %cst_17 = arith.constant 1.250000e-01 : f32
    %43 = vector.broadcast %cst_17 : f32 to vector<1x128xf32>
    %44 = arith.mulf %40, %43 : vector<1x128xf32>
    %45 = arith.mulf %42, %42 : vector<1x128xf32>
    %46 = arith.subf %44, %45 : vector<1x128xf32>
    %cst_18 = arith.constant 0.000000e+00 : f32
    %47 = vector.broadcast %cst_18 : f32 to vector<1x128xf32>
    %48 = arith.maximumf %46, %47 : vector<1x128xf32>
    %cst_19 = arith.constant 9.99999974E-6 : f32
    %49 = vector.broadcast %cst_19 : f32 to vector<1x128xf32>
    %50 = arith.addf %48, %49 : vector<1x128xf32>
    %51 = math.rsqrt %50 : vector<1x128xf32>
    %52 = vector.extract_strided_slice %0 {offsets = [2, 0], sizes = [1, 128], strides = [1, 1]} : vector<8x128xf32> to vector<1x128xf32>
    %53 = vector.extract_strided_slice %0 {offsets = [3, 0], sizes = [1, 128], strides = [1, 1]} : vector<8x128xf32> to vector<1x128xf32>
    %54 = arith.mulf %52, %51 : vector<1x128xf32>
    %55 = arith.mulf %42, %54 : vector<1x128xf32>
    %56 = arith.subf %53, %55 : vector<1x128xf32>
    %57 = vector.broadcast %54 : vector<1x128xf32> to vector<8x128xf32>
    %58 = arith.mulf %35, %57 : vector<8x128xf32>
    %59 = vector.broadcast %56 : vector<1x128xf32> to vector<8x128xf32>
    %60 = arith.addf %58, %59 : vector<8x128xf32>
    %cst_20 = arith.constant 0.000000e+00 : f32
    %61 = vector.broadcast %cst_20 : f32 to vector<8x128xf32>
    %62 = arith.maximumf %60, %61 : vector<8x128xf32>
    %63 = vector.extract_strided_slice %62 {offsets = [0, 0], sizes = [8, 32], strides = [1, 1]} : vector<8x128xf32> to vector<8x32xf32>
    %64 = arith.truncf %63 : vector<8x32xf32> to vector<8x32xbf16>
    %c80 = arith.constant 80 : index
    %c0_21 = arith.constant 0 : index
    %65 = vector.load %arg1[%c80, %c0_21] : memref<144x128xbf16, #tpu.memory_space<vmem>>, vector<32x128xbf16>
    %cst_22 = arith.constant dense<0.000000e+00> : vector<8x128xf32>
    %66 = tpu.matmul %64, %65, %cst_22 {dimension_numbers = #tpu.dot_dimension_numbers<[1], [0], [0], [1], [0, 0, 1, 1], [], []>} : vector<8x32xbf16>, vector<32x128xbf16>, vector<8x128xf32> -> vector<8x128xf32>
    %cst_23 = arith.constant dense<0.000000e+00> : vector<128xf32>
    %67 = vector.multi_reduction <add>, %66, %cst_23 [0] : vector<8x128xf32> to vector<128xf32>
    %68 = vector.shape_cast %67 : vector<128xf32> to vector<1x128xf32>
    %69 = arith.mulf %66, %66 : vector<8x128xf32>
    %cst_24 = arith.constant dense<0.000000e+00> : vector<128xf32>
    %70 = vector.multi_reduction <add>, %69, %cst_24 [0] : vector<8x128xf32> to vector<128xf32>
    %71 = vector.shape_cast %70 : vector<128xf32> to vector<1x128xf32>
    %cst_25 = arith.constant 1.250000e-01 : f32
    %72 = vector.broadcast %cst_25 : f32 to vector<1x128xf32>
    %73 = arith.mulf %68, %72 : vector<1x128xf32>
    %cst_26 = arith.constant 1.250000e-01 : f32
    %74 = vector.broadcast %cst_26 : f32 to vector<1x128xf32>
    %75 = arith.mulf %71, %74 : vector<1x128xf32>
    %76 = arith.mulf %73, %73 : vector<1x128xf32>
    %77 = arith.subf %75, %76 : vector<1x128xf32>
    %cst_27 = arith.constant 0.000000e+00 : f32
    %78 = vector.broadcast %cst_27 : f32 to vector<1x128xf32>
    %79 = arith.maximumf %77, %78 : vector<1x128xf32>
    %cst_28 = arith.constant 9.99999974E-6 : f32
    %80 = vector.broadcast %cst_28 : f32 to vector<1x128xf32>
    %81 = arith.addf %79, %80 : vector<1x128xf32>
    %82 = math.rsqrt %81 : vector<1x128xf32>
    %83 = vector.extract_strided_slice %0 {offsets = [4, 0], sizes = [1, 128], strides = [1, 1]} : vector<8x128xf32> to vector<1x128xf32>
    %84 = vector.extract_strided_slice %0 {offsets = [5, 0], sizes = [1, 128], strides = [1, 1]} : vector<8x128xf32> to vector<1x128xf32>
    %85 = arith.mulf %83, %82 : vector<1x128xf32>
    %86 = arith.mulf %73, %85 : vector<1x128xf32>
    %87 = arith.subf %84, %86 : vector<1x128xf32>
    %88 = vector.broadcast %85 : vector<1x128xf32> to vector<8x128xf32>
    %89 = arith.mulf %66, %88 : vector<8x128xf32>
    %90 = vector.broadcast %87 : vector<1x128xf32> to vector<8x128xf32>
    %91 = arith.addf %89, %90 : vector<8x128xf32>
    %cst_29 = arith.constant 0.000000e+00 : f32
    %92 = vector.broadcast %cst_29 : f32 to vector<8x128xf32>
    %93 = arith.maximumf %91, %92 : vector<8x128xf32>
    %94 = vector.extract_strided_slice %93 {offsets = [0, 0], sizes = [8, 32], strides = [1, 1]} : vector<8x128xf32> to vector<8x32xf32>
    %95 = arith.truncf %94 : vector<8x32xf32> to vector<8x32xbf16>
    %c112 = arith.constant 112 : index
    %c0_30 = arith.constant 0 : index
    %96 = vector.load %arg1[%c112, %c0_30] : memref<144x128xbf16, #tpu.memory_space<vmem>>, vector<32x128xbf16>
    %cst_31 = arith.constant dense<0.000000e+00> : vector<8x128xf32>
    %97 = tpu.matmul %95, %96, %cst_31 {dimension_numbers = #tpu.dot_dimension_numbers<[1], [0], [0], [1], [0, 0, 1, 1], [], []>} : vector<8x32xbf16>, vector<32x128xbf16>, vector<8x128xf32> -> vector<8x128xf32>
    %98 = math.exp %97 : vector<8x128xf32>
    %cst_32 = arith.constant dense<0.000000e+00> : vector<128xf32>
    %99 = vector.multi_reduction <add>, %98, %cst_32 [0] : vector<8x128xf32> to vector<128xf32>
    %100 = vector.shape_cast %99 : vector<128xf32> to vector<1x128xf32>
    %101 = tpu.reciprocal %100 {approx = true} : vector<1x128xf32> -> vector<1x128xf32>
    %102 = vector.broadcast %101 : vector<1x128xf32> to vector<8x128xf32>
    %103 = arith.mulf %98, %102 : vector<8x128xf32>
    %c0_33 = arith.constant 0 : index
    %c0_34 = arith.constant 0 : index
    %104 = vector.load %arg3[%c0_33, %c0_34] : memref<8x128xf32, #tpu.memory_space<vmem>>, vector<8x128xf32>
    tpu.vector_store %arg3[%c0_33, %c0_34], %103 {strides = array<i32>} : memref<8x128xf32, #tpu.memory_space<vmem>>, vector<8x128xf32>,
    return
  }
}

</mosaic_0001>

<llo_original>
// kernel: tpu_custom_call.1
$region0: #{tpu_custom_call.1}
  #allocation0 [shape = 'u32[]', space=smem, size = 0x4, offset = 0x4, fixed_abs, tag = 'smem constant byte address 0x4 - core index']
  #allocation1 [shape = 'u32[144,128]{1,0:T(1,128)}', space=vmem, size = 0x12000, scoped, tag = 'internal scratch']
  %s0 = inlined_call_operand.hbm [shape: f32[8,16], index: 0, kind: input, shape index: {}]
  %s1 = inlined_call_operand.hbm [shape: bf16[144,128], index: 1, kind: input, shape index: {}]
  %s2 = inlined_call_operand.hbm [shape: f32[8,128], index: 2, kind: input, shape index: {}]
  %s3 = inlined_call_operand.hbm [shape: f32[8,128], index: 3, kind: output, shape index: {}]
  %s4 = sld [smem:[#allocation0]]
  $region34: #{tpu_custom_call.1} parent=0
    _
  %s6 = ssub.s32 1, %s4
  %s7 = scalar_select 0, %s6, %s4
  $region1: #{tpu_custom_call.1} parent=0
    #allocation2 [shape = 'u8[4096]{0}', space=vmem, size = 0x1000, scoped, tag = 'input window, operand 0, single buffered']
    #allocation3 [shape = 's32[1]{0}', space=sflag, size = 0x4, scoped, tag = 'scoped memory for tpu_custom_call.1']
    #allocation4 [shape = 's32[1]{0}', space=sflag, size = 0x4, scoped, tag = 'scoped memory for tpu_custom_call.1']
    #allocation5 [shape = 'u8[36864]{0}', space=vmem, size = 0x9000, scoped, tag = 'input window, operand 1, single buffered']
    #allocation6 [shape = 's32[1]{0}', space=sflag, size = 0x4, scoped, tag = 'scoped memory for tpu_custom_call.1']
    #allocation7 [shape = 'u8[4096]{0}', space=vmem, size = 0x1000, scoped, tag = 'input window, operand 2, single buffered']
    #allocation8 [shape = 'u8[4096]{0}', space=vmem, size = 0x1000, scoped, tag = 'output window, operand 0, single buffered']
    %8 = vsyncpa [#allocation3], 0
    %9 = vsyncpa [#allocation6], 0
    %10 = vsyncpa [#allocation4], 0
    // Predicated region
    $region2: #{tpu_custom_call.1} parent=1 // pred_check
      _
    $region3: #{tpu_custom_call.1} parent=1 // pred_check_branch
      %12 = sbr.rel (0) target = $region5
    $region4: #{tpu_custom_call.1} parent=1 // pred_region
      %s14 = ssub.s32 128, 128
      %15 = vsyncadd [#allocation3], %s14
      %s17 = sshll.u32 [#allocation2], 4
      %s18 = int_to_ptr.vmem [resolvable:$true] %s17
      %20 = dma.hbm_to_vmem [thread:$0]  %s0, 128, %s18, [#allocation3]
    $region5: #{tpu_custom_call.1} parent=1 // pred_fallthru
      _
    // Predicated region
    $region6: #{tpu_custom_call.1} parent=1 // pred_check
      _
    $region7: #{tpu_custom_call.1} parent=1 // pred_check_branch
      %22 = sbr.rel (0) target = $region9
    $region8: #{tpu_custom_call.1} parent=1 // pred_region
      %s24 = ssub.s32 1152, 1152
      %25 = vsyncadd [#allocation6], %s24
      %s26 = sshll.u32 [#allocation5], 4
      %s27 = int_to_ptr.vmem [resolvable:$true] %s26
      %32 = dma.hbm_to_vmem [thread:$0]  %s1, 1152, %s27, [#allocation6], 64, 64, 4
    $region9: #{tpu_custom_call.1} parent=1 // pred_fallthru
      _
    // Predicated region
    $region10: #{tpu_custom_call.1} parent=1 // pred_check
      _
    $region11: #{tpu_custom_call.1} parent=1 // pred_check_branch
      %34 = sbr.rel (0) target = $region13
    $region12: #{tpu_custom_call.1} parent=1 // pred_region
      %s36 = ssub.s32 128, 128
      %37 = vsyncadd [#allocation6], %s36
      %s39 = sshll.u32 [#allocation7], 4
      %s40 = int_to_ptr.vmem [resolvable:$true] %s39
      %42 = dma.hbm_to_vmem [thread:$0]  %s2, 128, %s40, [#allocation6]
    $region13: #{tpu_custom_call.1} parent=1 // pred_fallthru
      _
    // Predicated region
    $region14: #{tpu_custom_call.1} parent=1 // pred_check
      _
    $region15: #{tpu_custom_call.1} parent=1 // pred_check_branch
      %44 = sbr.rel (0) target = $region17
    $region16: #{tpu_custom_call.1} parent=1 // pred_region
      %45 = dma.done [#allocation3], 128
    $region17: #{tpu_custom_call.1} parent=1 // pred_fallthru
      _
    // Predicated region
    $region18: #{tpu_custom_call.1} parent=1 // pred_check
      _
    $region19: #{tpu_custom_call.1} parent=1 // pred_check_branch
      %47 = sbr.rel (0) target = $region21
    $region20: #{tpu_custom_call.1} parent=1 // pred_region
      %48 = dma.done [#allocation6], 1152
    $region21: #{tpu_custom_call.1} parent=1 // pred_fallthru
      _
    // Predicated region
    $region22: #{tpu_custom_call.1} parent=1 // pred_check
      _
    $region23: #{tpu_custom_call.1} parent=1 // pred_check_branch
      %50 = sbr.rel (0) target = $region25
    $region24: #{tpu_custom_call.1} parent=1 // pred_region
      %51 = dma.done [#allocation6], 128
    $region25: #{tpu_custom_call.1} parent=1 // pred_fallthru
      _
    %v53 = vld [vmem:[#allocation7] sm:$0xff]
    %v54 = vld [vmem:[#allocation2] sm:$0xff]
    %v55 = vpack.c.bf16 %v54, %v54
    %v56 = vld [vmem:[#allocation5] sm:$0xf]
    %v57 = vld [vmem:[#allocation5 + $0x4] sm:$0xf]
    %v60 = vunpack.c.l.b16 %v56
    %v61 = vunpack.c.l.b16 %v57
    %v62 = vpack.c.b16 %v61, %v60
    %vm64 = vcmask 130048
    %v66 = vsel %vm64, %v55, 0
    %68 = vmatprep.subr.bf16.mxu0 0
    %69 = vmatpush1.bf16.msra.mxu0 %v62
    %70 = vmatprep.subr.bf16.mxu0 0
    %71 = vmatpush1.bf16.msra.mxu0 0
    %72 = vmatprep.subr.bf16.mxu0 0
    %73 = vmatpush1.bf16.msra.mxu0 0
    %74 = vmatprep.subr.bf16.mxu0 0
    %75 = vmatpush1.bf16.msra.mxu0 0
    %76 = vmatprep.subr.bf16.mxu0 0
    %77 = vmatpush1.bf16.msra.mxu0 0
    %78 = vmatprep.subr.bf16.mxu0 0
    %79 = vmatpush1.bf16.msra.mxu0 0
    %80 = vmatprep.subr.bf16.mxu0 0
    %81 = vmatpush1.bf16.msra.mxu0 0
    %82 = vmatprep.subr.bf16.mxu0 0
    %83 = vmatpush1.bf16.msra.mxu0 0
    %84 = vmatprep.subr.bf16.mxu0 0
    %85 = vmatpush1.bf16.msra.mxu0 0
    %86 = vmatprep.subr.bf16.mxu0 0
    %87 = vmatpush1.bf16.msra.mxu0 0
    %88 = vmatprep.subr.bf16.mxu0 0
    %89 = vmatpush1.bf16.msra.mxu0 0
    %90 = vmatprep.subr.bf16.mxu0 0
    %91 = vmatpush1.bf16.msra.mxu0 0
    %92 = vmatprep.subr.bf16.mxu0 0
    %93 = vmatpush1.bf16.msra.mxu0 0
    %94 = vmatprep.subr.bf16.mxu0 0
    %95 = vmatpush1.bf16.msra.mxu0 0
    %96 = vmatprep.subr.bf16.mxu0 0
    %97 = vmatpush1.bf16.msra.mxu0 0
    %98 = vmatprep.subr.bf16.mxu0 0
    %99 = vmatpush1.bf16.msra.mxu0 0
    %100 = vmatprep.mubr.bf16.mxu0 0
    %101 = vmatmul.mubr.bf16.gmra.mrb[0].mxu0 %v66
    %v102 = vpop.f32.mrb[0].mxu0
    %v103 = vadd.f32 0.0, %v102
    %v104 = vpop.f32.mrb[0].mxu0
    %v105 = vpop.f32.mrb[0].mxu0
    %v106 = vpop.f32.mrb[0].mxu0
    %107 = vdwg.mxu0
    %v108 = vrot.slane %v103, 4
    %v109 = vadd.f32 %v103, %v108
    %v110 = vrot.slane %v109, 2
    %v111 = vadd.f32 %v109, %v110
    %v112 = vrot.slane %v111, 1
    %v113 = vadd.f32 %v111, %v112
    %v114 = vmul.f32 %v103, %v103
    %v115 = vrot.slane %v114, 4
    %v116 = vadd.f32 %v114, %v115
    %v117 = vrot.slane %v116, 2
    %v118 = vadd.f32 %v116, %v117
    %v119 = vrot.slane %v118, 1
    %v120 = vadd.f32 %v118, %v119
    %v121 = vmul.f32 %v113, 0.125
    %v122 = vmul.f32 %v120, 0.125
    %v123 = vmul.f32 %v121, %v121
    %v124 = vsub.f32 %v122, %v123
    %v125 = vmax.f32 %v124, 0.0
    %v126 = vadd.f32 %v125, 1e-05
    %v127 = vrsqrt.pop %v126
    %v128 = vmul.f32 %v53, %v127
    %v129 = vmul.f32 %v121, %v128
    %v131 = vrot.slane %v129, 7
    %v133 = vsub.f32 %v53, %v131
    %v134 = vlaneseq
    %v135 = vshrl.u32 %v134, 7
    %v136 = vsub.s32 0, %v135
    %v137 = vrot.slane %v128, %v136
    %v138 = vmul.f32 %v103, %v137
    %v139 = vlaneseq
    %v140 = vshrl.u32 %v139, 7
    %v141 = vsub.s32 1, %v140
    %v142 = vrot.slane %v133, %v141
    %v143 = vadd.f32 %v138, %v142
    %v144 = vmax.f32 %v143, 0.0
    %v145 = vpack.c.bf16 %v144, %v144
    %v146 = vld [vmem:[#allocation5 + $0x8] sm:$0xf]
    %v147 = vld [vmem:[#allocation5 + $0xc] sm:$0xf]
    %v148 = vld [vmem:[#allocation5 + $0x10] sm:$0xf]
    %v149 = vld [vmem:[#allocation5 + $0x14] sm:$0xf]
    %v150 = vld [vmem:[#allocation5 + $0x18] sm:$0xf]
    %v151 = vld [vmem:[#allocation5 + $0x1c] sm:$0xf]
    %v152 = vld [vmem:[#allocation5 + $0x20] sm:$0xf]
    %v153 = vld [vmem:[#allocation5 + $0x24] sm:$0xf]
    %v162 = vunpack.c.l.b16 %v146
    %v163 = vunpack.c.l.b16 %v147
    %v164 = vunpack.c.l.b16 %v148
    %v165 = vunpack.c.l.b16 %v149
    %v166 = vunpack.c.l.b16 %v150
    %v167 = vunpack.c.l.b16 %v151
    %v168 = vunpack.c.l.b16 %v152
    %v169 = vunpack.c.l.b16 %v153
    %v170 = vpack.c.b16 %v163, %v162
    %v171 = vpack.c.b16 %v165, %v164
    %v172 = vpack.c.b16 %v167, %v166
    %v173 = vpack.c.b16 %v169, %v168
    %vm178 = vcmask 523264
    %v180 = vsel %vm178, %v145, 0
    %182 = vmatprep.subr.bf16.mxu0 0
    %183 = vmatpush1.bf16.msra.mxu0 %v170
    %184 = vmatprep.subr.bf16.mxu0 0
    %185 = vmatpush1.bf16.msra.mxu0 %v171
    %186 = vmatprep.subr.bf16.mxu0 0
    %187 = vmatpush1.bf16.msra.mxu0 %v172
    %188 = vmatprep.subr.bf16.mxu0 0
    %189 = vmatpush1.bf16.msra.mxu0 %v173
    %190 = vmatprep.subr.bf16.mxu0 0
    %191 = vmatpush1.bf16.msra.mxu0 0
    %192 = vmatprep.subr.bf16.mxu0 0
    %193 = vmatpush1.bf16.msra.mxu0 0
    %194 = vmatprep.subr.bf16.mxu0 0
    %195 = vmatpush1.bf16.msra.mxu0 0
    %196 = vmatprep.subr.bf16.mxu0 0
    %197 = vmatpush1.bf16.msra.mxu0 0
    %198 = vmatprep.subr.bf16.mxu0 0
    %199 = vmatpush1.bf16.msra.mxu0 0
    %200 = vmatprep.subr.bf16.mxu0 0
    %201 = vmatpush1.bf16.msra.mxu0 0
    %202 = vmatprep.subr.bf16.mxu0 0
    %203 = vmatpush1.bf16.msra.mxu0 0
    %204 = vmatprep.subr.bf16.mxu0 0
    %205 = vmatpush1.bf16.msra.mxu0 0
    %206 = vmatprep.subr.bf16.mxu0 0
    %207 = vmatpush1.bf16.msra.mxu0 0
    %208 = vmatprep.subr.bf16.mxu0 0
    %209 = vmatpush1.bf16.msra.mxu0 0
    %210 = vmatprep.subr.bf16.mxu0 0
    %211 = vmatpush1.bf16.msra.mxu0 0
    %212 = vmatprep.subr.bf16.mxu0 0
    %213 = vmatpush1.bf16.msra.mxu0 0
    %214 = vmatprep.mubr.bf16.mxu0 0
    %215 = vmatmul.mubr.bf16.gmra.mrb[0].mxu0 %v180
    %v216 = vpop.f32.mrb[0].mxu0
    %v217 = vadd.f32 0.0, %v216
    %v218 = vpop.f32.mrb[0].mxu0
    %v219 = vpop.f32.mrb[0].mxu0
    %v220 = vpop.f32.mrb[0].mxu0
    %221 = vdwg.mxu0
    %v222 = vrot.slane %v217, 4
    %v223 = vadd.f32 %v217, %v222
    %v224 = vrot.slane %v223, 2
    %v225 = vadd.f32 %v223, %v224
    %v226 = vrot.slane %v225, 1
    %v227 = vadd.f32 %v225, %v226
    %v228 = vmul.f32 %v217, %v217
    %v229 = vrot.slane %v228, 4
    %v230 = vadd.f32 %v228, %v229
    %v231 = vrot.slane %v230, 2
    %v232 = vadd.f32 %v230, %v231
    %v233 = vrot.slane %v232, 1
    %v234 = vadd.f32 %v232, %v233
    %v235 = vmul.f32 %v227, 0.125
    %v236 = vmul.f32 %v234, 0.125
    %v237 = vmul.f32 %v235, %v235
    %v238 = vsub.f32 %v236, %v237
    %v239 = vmax.f32 %v238, 0.0
    %v240 = vadd.f32 %v239, 1e-05
    %v241 = vrsqrt.pop %v240
    %v242 = vmul.f32 %v53, %v241
    %v243 = vmul.f32 %v235, %v242
    %v245 = vrot.slane %v243, 7
    %v247 = vsub.f32 %v53, %v245
    %v248 = vlaneseq
    %v249 = vshrl.u32 %v248, 7
    %v250 = vsub.s32 2, %v249
    %v251 = vrot.slane %v242, %v250
    %v252 = vmul.f32 %v217, %v251
    %v253 = vlaneseq
    %v254 = vshrl.u32 %v253, 7
    %v255 = vsub.s32 3, %v254
    %v256 = vrot.slane %v247, %v255
    %v257 = vadd.f32 %v252, %v256
    %v258 = vmax.f32 %v257, 0.0
    %v259 = vpack.c.bf16 %v258, %v258
    %v260 = vld [vmem:[#allocation5 + $0x28] sm:$0xf]
    %v261 = vld [vmem:[#allocation5 + $0x2c] sm:$0xf]
    %v262 = vld [vmem:[#allocation5 + $0x30] sm:$0xf]
    %v263 = vld [vmem:[#allocation5 + $0x34] sm:$0xf]
    %v268 = vunpack.c.l.b16 %v260
    %v269 = vunpack.c.l.b16 %v261
    %v270 = vunpack.c.l.b16 %v262
    %v271 = vunpack.c.l.b16 %v263
    %v272 = vpack.c.b16 %v269, %v268
    %v273 = vpack.c.b16 %v271, %v270
    %vm276 = vcmask 261120
    %v278 = vsel %vm276, %v259, 0
    %280 = vmatprep.subr.bf16.mxu0 0
    %281 = vmatpush1.bf16.msra.mxu0 %v272
    %282 = vmatprep.subr.bf16.mxu0 0
    %283 = vmatpush1.bf16.msra.mxu0 %v273
    %284 = vmatprep.subr.bf16.mxu0 0
    %285 = vmatpush1.bf16.msra.mxu0 0
    %286 = vmatprep.subr.bf16.mxu0 0
    %287 = vmatpush1.bf16.msra.mxu0 0
    %288 = vmatprep.subr.bf16.mxu0 0
    %289 = vmatpush1.bf16.msra.mxu0 0
    %290 = vmatprep.subr.bf16.mxu0 0
    %291 = vmatpush1.bf16.msra.mxu0 0
    %292 = vmatprep.subr.bf16.mxu0 0
    %293 = vmatpush1.bf16.msra.mxu0 0
    %294 = vmatprep.subr.bf16.mxu0 0
    %295 = vmatpush1.bf16.msra.mxu0 0
    %296 = vmatprep.subr.bf16.mxu0 0
    %297 = vmatpush1.bf16.msra.mxu0 0
    %298 = vmatprep.subr.bf16.mxu0 0
    %299 = vmatpush1.bf16.msra.mxu0 0
    %300 = vmatprep.subr.bf16.mxu0 0
    %301 = vmatpush1.bf16.msra.mxu0 0
    %302 = vmatprep.subr.bf16.mxu0 0
    %303 = vmatpush1.bf16.msra.mxu0 0
    %304 = vmatprep.subr.bf16.mxu0 0
    %305 = vmatpush1.bf16.msra.mxu0 0
    %306 = vmatprep.subr.bf16.mxu0 0
    %307 = vmatpush1.bf16.msra.mxu0 0
    %308 = vmatprep.subr.bf16.mxu0 0
    %309 = vmatpush1.bf16.msra.mxu0 0
    %310 = vmatprep.subr.bf16.mxu0 0
    %311 = vmatpush1.bf16.msra.mxu0 0
    %312 = vmatprep.mubr.bf16.mxu0 0
    %313 = vmatmul.mubr.bf16.gmra.mrb[0].mxu0 %v278
    %v314 = vpop.f32.mrb[0].mxu0
    %v315 = vadd.f32 0.0, %v314
    %v316 = vpop.f32.mrb[0].mxu0
    %v317 = vpop.f32.mrb[0].mxu0
    %v318 = vpop.f32.mrb[0].mxu0
    %319 = vdwg.mxu0
    %v320 = vrot.slane %v315, 4
    %v321 = vadd.f32 %v315, %v320
    %v322 = vrot.slane %v321, 2
    %v323 = vadd.f32 %v321, %v322
    %v324 = vrot.slane %v323, 1
    %v325 = vadd.f32 %v323, %v324
    %v326 = vmul.f32 %v315, %v315
    %v327 = vrot.slane %v326, 4
    %v328 = vadd.f32 %v326, %v327
    %v329 = vrot.slane %v328, 2
    %v330 = vadd.f32 %v328, %v329
    %v331 = vrot.slane %v330, 1
    %v332 = vadd.f32 %v330, %v331
    %v333 = vmul.f32 %v325, 0.125
    %v334 = vmul.f32 %v332, 0.125
    %v335 = vmul.f32 %v333, %v333
    %v336 = vsub.f32 %v334, %v335
    %v337 = vmax.f32 %v336, 0.0
    %v338 = vadd.f32 %v337, 1e-05
    %v339 = vrsqrt.pop %v338
    %v340 = vmul.f32 %v53, %v339
    %v341 = vmul.f32 %v333, %v340
    %v343 = vrot.slane %v341, 7
    %v345 = vsub.f32 %v53, %v343
    %v346 = vlaneseq
    %v347 = vshrl.u32 %v346, 7
    %v348 = vsub.s32 4, %v347
    %v349 = vrot.slane %v340, %v348
    %v350 = vmul.f32 %v315, %v349
    %v351 = vlaneseq
    %v352 = vshrl.u32 %v351, 7
    %v353 = vsub.s32 5, %v352
    %v354 = vrot.slane %v345, %v353
    %v355 = vadd.f32 %v350, %v354
    %v356 = vmax.f32 %v355, 0.0
    %v357 = vpack.c.bf16 %v356, %v356
    %v358 = vld [vmem:[#allocation5 + $0x38] sm:$0xf]
    %v359 = vld [vmem:[#allocation5 + $0x3c] sm:$0xf]
    %v360 = vld [vmem:[#allocation5 + $0x40] sm:$0xf]
    %v361 = vld [vmem:[#allocation5 + $0x44] sm:$0xf]
    %v366 = vunpack.c.l.b16 %v358
    %v367 = vunpack.c.l.b16 %v359
    %v368 = vunpack.c.l.b16 %v360
    %v369 = vunpack.c.l.b16 %v361
    %v370 = vpack.c.b16 %v367, %v366
    %v371 = vpack.c.b16 %v369, %v368
    %v375 = vsel %vm276, %v357, 0
    %377 = vmatprep.subr.bf16.mxu0 0
    %378 = vmatpush1.bf16.msra.mxu0 %v370
    %379 = vmatprep.subr.bf16.mxu0 0
    %380 = vmatpush1.bf16.msra.mxu0 %v371
    %381 = vmatprep.subr.bf16.mxu0 0
    %382 = vmatpush1.bf16.msra.mxu0 0
    %383 = vmatprep.subr.bf16.mxu0 0
    %384 = vmatpush1.bf16.msra.mxu0 0
    %385 = vmatprep.subr.bf16.mxu0 0
    %386 = vmatpush1.bf16.msra.mxu0 0
    %387 = vmatprep.subr.bf16.mxu0 0
    %388 = vmatpush1.bf16.msra.mxu0 0
    %389 = vmatprep.subr.bf16.mxu0 0
    %390 = vmatpush1.bf16.msra.mxu0 0
    %391 = vmatprep.subr.bf16.mxu0 0
    %392 = vmatpush1.bf16.msra.mxu0 0
    %393 = vmatprep.subr.bf16.mxu0 0
    %394 = vmatpush1.bf16.msra.mxu0 0
    %395 = vmatprep.subr.bf16.mxu0 0
    %396 = vmatpush1.bf16.msra.mxu0 0
    %397 = vmatprep.subr.bf16.mxu0 0
    %398 = vmatpush1.bf16.msra.mxu0 0
    %399 = vmatprep.subr.bf16.mxu0 0
    %400 = vmatpush1.bf16.msra.mxu0 0
    %401 = vmatprep.subr.bf16.mxu0 0
    %402 = vmatpush1.bf16.msra.mxu0 0
    %403 = vmatprep.subr.bf16.mxu0 0
    %404 = vmatpush1.bf16.msra.mxu0 0
    %405 = vmatprep.subr.bf16.mxu0 0
    %406 = vmatpush1.bf16.msra.mxu0 0
    %407 = vmatprep.subr.bf16.mxu0 0
    %408 = vmatpush1.bf16.msra.mxu0 0
    %409 = vmatprep.mubr.bf16.mxu0 0
    %410 = vmatmul.mubr.bf16.gmra.mrb[0].mxu0 %v375
    %v411 = vpop.f32.mrb[0].mxu0
    %v412 = vadd.f32 0.0, %v411
    %v413 = vpop.f32.mrb[0].mxu0
    %v414 = vpop.f32.mrb[0].mxu0
    %v415 = vpop.f32.mrb[0].mxu0
    %416 = vdwg.mxu0
    %v417 = vmul.f32 %v412, 1.442695
    %v418 = vpow.pop %v417
    %v419 = vrot.slane %v418, 4
    %v420 = vadd.f32 %v418, %v419
    %v421 = vrot.slane %v420, 2
    %v422 = vadd.f32 %v420, %v421
    %v423 = vrot.slane %v422, 1
    %v424 = vadd.f32 %v422, %v423
    %v425 = vrcp.pop %v424
    %v426 = vmul.f32 %v418, %v425
    %427 = vst [vmem:[#allocation8] sm:$0xff] %v426
    // Predicated region
    $region26: #{tpu_custom_call.1} parent=1 // pred_check
      _
    $region27: #{tpu_custom_call.1} parent=1 // pred_check_branch
      %429 = sbr.rel (0) target = $region29
    $region28: #{tpu_custom_call.1} parent=1 // pred_region
      %s431 = ssub.s32 128, 128
      %432 = vsyncadd [#allocation4], %s431
      %s434 = sshll.u32 [#allocation8], 4
      %s435 = int_to_ptr.vmem [resolvable:$true] %s434
      %437 = dma.vmem_to_hbm [thread:$0]  %s435, 128, %s3, [#allocation4]
    $region29: #{tpu_custom_call.1} parent=1 // pred_fallthru
      _
    // Predicated region
    $region30: #{tpu_custom_call.1} parent=1 // pred_check
      _
    $region31: #{tpu_custom_call.1} parent=1 // pred_check_branch
      %439 = sbr.rel (0) target = $region33
    $region32: #{tpu_custom_call.1} parent=1 // pred_region
      %440 = dma.done [#allocation4], 128
    $region33: #{tpu_custom_call.1} parent=1 // pred_fallthru
      _
    %441 = vsyncpa [#allocation3], 1
    %442 = vsyncpa [#allocation6], 1
    %443 = vsyncpa [#allocation4], 1

</llo_original>
